<compile_context>
chip_gen: v5e
topology: v5e:2x2
jax: 0.10.0
libtpu: 0.0.40
codegen_flags: <defaults>
</compile_context>

<pallas_src>
import math

import numpy as np
import jax
import jax.numpy as jnp
from jax.experimental import pallas as pl
from jax.experimental.pallas import tpu as pltpu


def _round_up(x, m):
    return (x + m - 1) // m * m


def _cat_embedding_kernel(ids_ref, table_ref, bias_ref, out_ref):
    # ids_ref  : (TB, F)    int32 -- offset-adjusted category ids for this batch tile
    # table_ref: (N, D)            -- full embedding table, resident in VMEM
    # bias_ref : (F, D)     f32    -- per-feature bias, resident in VMEM
    # out_ref  : (TB, F*D)         -- lane-dense packed output tile
    tb, num_f = ids_ref.shape
    n_total, d = table_ref.shape
    scale = jnp.float32(math.sqrt(d))

    # Shared column iota, hoisted out of the feature loop (JAX does not CSE broadcasts).
    cols = jax.lax.broadcasted_iota(jnp.int32, (tb, n_total), 1)       # (TB, N)

    pieces = []
    for f in range(num_f):                                             # static, small F
        # One-hot gather for this feature's column of ids (MXU matmul = exact row pick).
        onehot = (ids_ref[:, f:f + 1] == cols).astype(table_ref.dtype)  # (TB, N)
        emb = jnp.dot(onehot, table_ref[...],
                      preferred_element_type=jnp.float32)               # (TB, D) f32
        # Per-feature bias (same across categories of the feature).
        emb = emb + bias_ref[f:f + 1, :]                                # (1, D) broadcast
        # F.normalize semantics (eps=1e-12) fused with the sqrt(dim) scale:
        # max(||x||, 1e-12) == rsqrt(max(||x||^2, 1e-24)); rsqrt runs on the EUP slot.
        sumsq = jnp.sum(emb * emb, axis=-1, keepdims=True)              # (TB, 1)
        inv = jax.lax.rsqrt(jnp.maximum(sumsq, jnp.float32(1e-24)))
        pieces.append(emb * (inv * scale))                              # (TB, D)

    # Assemble the lane-dense (TB, F*D) slab in registers and issue one dense store.
    out_ref[...] = jnp.concatenate(pieces, axis=-1).astype(out_ref.dtype)


def cat_embedding_forward(x, emb_table, categories, cat_bias=None, *,
                          table_dtype=jnp.float32, out_dtype=jnp.float32,
                          batch_tile=None):
    """CatEmbedding forward.

    x          : [B, F] integer per-feature category ids
    emb_table  : [sum(categories), D] embedding table
    categories : static tuple of per-feature category counts (len F)
    cat_bias   : optional [F, D] per-feature bias
    returns    : [B, F, D] in out_dtype
    """
    b, f = x.shape
    n_total, d = emb_table.shape
    categories = tuple(int(c) for c in categories)
    assert len(categories) == f and sum(categories) == n_total

    # Static per-feature offsets; the offset add is O(B*F) ints (cheap, stays here).
    offsets = np.concatenate(
        [np.zeros((1,), np.int64), np.cumsum(categories)[:-1]]).astype(np.int32)
    ids = x.astype(jnp.int32) + jnp.asarray(offsets)[None, :]           # (B, F)

    table = emb_table.astype(table_dtype)
    bias = (jnp.zeros((f, d), jnp.float32) if cat_bias is None
            else cat_bias.astype(jnp.float32))

    # ---- per-generation VMEM budgeting -------------------------------------------
    try:
        vmem_cap = int(pltpu.get_tpu_info().vmem_capacity_bytes)
    except Exception:
        vmem_cap = 64 * 1024 * 1024                    # conservative (v7x per-TC)
    budget = int(0.85 * vmem_cap)

    tbytes = jnp.dtype(table_dtype).itemsize
    obytes = jnp.dtype(out_dtype).itemsize
    table_bytes = n_total * d * tbytes                 # resident, SINGLE-buffered
    bias_bytes = f * d * 4
    fixed_bytes = table_bytes + bias_bytes
    # Per-batch-row cost of one grid step (tile buffers double-buffered, temporaries):
    per_row = (2 * f * 4                               # ids tile (x2 buffers)
               + 2 * f * d * obytes                    # out tile (x2 buffers)
               + f * d * 4                             # normalized pieces (f32) until concat
               + 2 * n_total * max(tbytes, 4)          # one-hot temporaries
               + 2 * d * 4)                            # emb temporaries
    if fixed_bytes + 8 * per_row > budget:
        # TODO(synk): switch to HBM-resident table + scalar-prefetch/DMA row gather here.
        raise NotImplementedError(
            "embedding table too large for the VMEM-resident one-hot path")

    # Batch tile: target ~4096 (b, f) rows per step, bounded by the VMEM budget.
    if batch_tile is None:
        batch_tile = max(8, (4096 // f) // 8 * 8)
    tb = min(int(batch_tile), (budget - fixed_bytes) // per_row)
    tb = max(8, (tb // 8) * 8)
    tb = min(tb, _round_up(b, 8))

    b_pad = _round_up(b, tb)
    if b_pad != b:
        ids = jnp.pad(ids, ((0, b_pad - b), (0, 0)))   # padded rows gather table row 0

    vmem_limit = min(int(0.9 * vmem_cap),
                     max(int(fixed_bytes + 1.5 * tb * per_row) + (2 << 20), 16 << 20))

    out = pl.pallas_call(
        _cat_embedding_kernel,
        out_shape=jax.ShapeDtypeStruct((b_pad, f * d), out_dtype),
        grid=(b_pad // tb,),
        in_specs=[
            pl.BlockSpec((tb, f), lambda i: (i, 0)),               # this tile's ids
            pl.BlockSpec(memory_space=pltpu.MemorySpace.VMEM),     # whole table, single copy
            pl.BlockSpec(memory_space=pltpu.MemorySpace.VMEM),     # (F, D) bias, single copy
        ],
        out_specs=pl.BlockSpec((tb, f * d), lambda i: (i, 0)),     # lane-dense slab
        compiler_params=pltpu.CompilerParams(
            dimension_semantics=("parallel",),
            vmem_limit_bytes=vmem_limit,
        ),
    )(ids, table, bias)
    return out[:b].reshape(b, f, d)


if __name__ == "__main__":
    key = jax.random.PRNGKey(0)

    # Module config: dim=32, 8 categorical features, bias=True
    dim = 32
    categories = (3, 5, 4, 7, 2, 6, 3, 8)
    f = len(categories)
    b = 4
    n_total = sum(categories)

    k_emb, k_bias, k_x = jax.random.split(key, 3)
    # nn.init.normal_(weight, std=cat_emb_init_sigma=0.001)
    emb_table = 0.001 * jax.random.normal(k_emb, (n_total, dim), jnp.float32)
    # bias initializes to zeros in the module; use a small random bias here so the
    # bias path is actually exercised.
    cat_bias = 0.001 * jax.random.normal(k_bias, (f, dim), jnp.float32)

    # per-feature category ids in [0, categories[f])
    cat = jnp.array(categories, jnp.int32)
    x = jax.random.randint(k_x, (b, f), 0, cat[None, :], dtype=jnp.int32)

    out = jax.block_until_ready(
        cat_embedding_forward(x, emb_table, categories, cat_bias))

    # pure-JAX reference (torch semantics: gather -> +bias -> F.normalize -> *sqrt(dim))
    offsets = jnp.asarray(
        np.concatenate([[0], np.cumsum(categories)[:-1]]).astype(np.int32))
    ids_ref = x + offsets[None, :]
    ref = emb_table[ids_ref] + cat_bias[None, :, :]
    nrm = jnp.sqrt(jnp.sum(ref * ref, axis=2, keepdims=True))
    ref = ref / jnp.maximum(nrm, 1e-12) * jnp.float32(math.sqrt(dim))

    assert out.shape == (b, f, dim), out.shape
    assert jnp.allclose(out, ref, atol=1e-4, rtol=1e-4), \
        float(jnp.max(jnp.abs(out - ref)))
    print("KERNEL_OK")
</pallas_src>

<mosaic_0001>
module attributes {stable_mosaic.version = 11 : i64} {
  func.func @_cat_embedding_kernel(%arg0: i32, %arg1: memref<8x8xi32, #tpu.memory_space<vmem>>, %arg2: memref<38x32xf32, #tpu.memory_space<vmem>>, %arg3: memref<8x32xf32, #tpu.memory_space<vmem>>, %arg4: memref<8x256xf32, #tpu.memory_space<vmem>>) attributes {dimension_semantics = [#tpu.dimension_semantics<parallel>], iteration_bounds = array<i64: 1>, scalar_prefetch = 0 : i64, scratch_operands = 0 : i64, tpu.core_type = #tpu.core_type<tc>, window_params = [{transform_indices = @transform_0, window_bounds = array<i64: 8, 8>}, {pipeline_mode = #tpu.pipeline_mode<synchronous>, transform_indices = @transform_1, window_bounds = array<i64: 38, 32>}, {pipeline_mode = #tpu.pipeline_mode<synchronous>, transform_indices = @transform_2, window_bounds = array<i64: 8, 32>}, {transform_indices = @transform_3, window_bounds = array<i64: 8, 256>}]} {
    %0 = tpu.iota {dimensions = array<i32: 1>} : vector<8x38xi32>
    %c0 = arith.constant 0 : index
    %c0_0 = arith.constant 0 : index
    %1 = vector.load %arg1[%c0, %c0_0] : memref<8x8xi32, #tpu.memory_space<vmem>>, vector<8x1xi32>
    %2 = vector.broadcast %1 : vector<8x1xi32> to vector<8x38xi32>
    %3 = arith.cmpi eq, %2, %0 : vector<8x38xi32>
    %4 = arith.extui %3 : vector<8x38xi1> to vector<8x38xi32>
    %5 = arith.sitofp %4 : vector<8x38xi32> to vector<8x38xf32>
    %c0_1 = arith.constant 0 : index
    %c0_2 = arith.constant 0 : index
    %6 = vector.load %arg2[%c0_1, %c0_2] : memref<38x32xf32, #tpu.memory_space<vmem>>, vector<38x32xf32>
    %cst = arith.constant dense<0.000000e+00> : vector<8x32xf32>
    %7 = tpu.matmul %5, %6, %cst {dimension_numbers = #tpu.dot_dimension_numbers<[1], [0], [0], [1], [0, 0, 1, 1], [], []>} : vector<8x38xf32>, vector<38x32xf32>, vector<8x32xf32> -> vector<8x32xf32>
    %c0_3 = arith.constant 0 : index
    %c0_4 = arith.constant 0 : index
    %8 = vector.load %arg3[%c0_3, %c0_4] : memref<8x32xf32, #tpu.memory_space<vmem>>, vector<1x32xf32>
    %9 = vector.broadcast %8 : vector<1x32xf32> to vector<8x32xf32>
    %10 = arith.addf %7, %9 : vector<8x32xf32>
    %11 = arith.mulf %10, %10 : vector<8x32xf32>
    %cst_5 = arith.constant dense<0.000000e+00> : vector<8xf32>
    %12 = vector.multi_reduction <add>, %11, %cst_5 [1] : vector<8x32xf32> to vector<8xf32>
    %13 = vector.shape_cast %12 : vector<8xf32> to vector<8x1xf32>
    %cst_6 = arith.constant 1.000000e-24 : f32
    %14 = vector.broadcast %cst_6 : f32 to vector<8x1xf32>
    %15 = arith.maximumf %13, %14 : vector<8x1xf32>
    %16 = math.rsqrt %15 : vector<8x1xf32>
    %cst_7 = arith.constant 5.65685415 : f32
    %17 = vector.broadcast %cst_7 : f32 to vector<8x1xf32>
    %18 = arith.mulf %16, %17 : vector<8x1xf32>
    %19 = vector.broadcast %18 : vector<8x1xf32> to vector<8x32xf32>
    %20 = arith.mulf %10, %19 : vector<8x32xf32>
    %c0_8 = arith.constant 0 : index
    %c1 = arith.constant 1 : index
    %21 = vector.load %arg1[%c0_8, %c1] : memref<8x8xi32, #tpu.memory_space<vmem>>, vector<8x1xi32>
    %22 = vector.broadcast %21 : vector<8x1xi32> to vector<8x38xi32>
    %23 = arith.cmpi eq, %22, %0 : vector<8x38xi32>
    %24 = arith.extui %23 : vector<8x38xi1> to vector<8x38xi32>
    %25 = arith.sitofp %24 : vector<8x38xi32> to vector<8x38xf32>
    %c0_9 = arith.constant 0 : index
    %c0_10 = arith.constant 0 : index
    %26 = vector.load %arg2[%c0_9, %c0_10] : memref<38x32xf32, #tpu.memory_space<vmem>>, vector<38x32xf32>
    %cst_11 = arith.constant dense<0.000000e+00> : vector<8x32xf32>
    %27 = tpu.matmul %25, %26, %cst_11 {dimension_numbers = #tpu.dot_dimension_numbers<[1], [0], [0], [1], [0, 0, 1, 1], [], []>} : vector<8x38xf32>, vector<38x32xf32>, vector<8x32xf32> -> vector<8x32xf32>
    %c1_12 = arith.constant 1 : index
    %c0_13 = arith.constant 0 : index
    %28 = vector.load %arg3[%c1_12, %c0_13] : memref<8x32xf32, #tpu.memory_space<vmem>>, vector<1x32xf32>
    %29 = vector.broadcast %28 : vector<1x32xf32> to vector<8x32xf32>
    %30 = arith.addf %27, %29 : vector<8x32xf32>
    %31 = arith.mulf %30, %30 : vector<8x32xf32>
    %cst_14 = arith.constant dense<0.000000e+00> : vector<8xf32>
    %32 = vector.multi_reduction <add>, %31, %cst_14 [1] : vector<8x32xf32> to vector<8xf32>
    %33 = vector.shape_cast %32 : vector<8xf32> to vector<8x1xf32>
    %cst_15 = arith.constant 1.000000e-24 : f32
    %34 = vector.broadcast %cst_15 : f32 to vector<8x1xf32>
    %35 = arith.maximumf %33, %34 : vector<8x1xf32>
    %36 = math.rsqrt %35 : vector<8x1xf32>
    %cst_16 = arith.constant 5.65685415 : f32
    %37 = vector.broadcast %cst_16 : f32 to vector<8x1xf32>
    %38 = arith.mulf %36, %37 : vector<8x1xf32>
    %39 = vector.broadcast %38 : vector<8x1xf32> to vector<8x32xf32>
    %40 = arith.mulf %30, %39 : vector<8x32xf32>
    %c0_17 = arith.constant 0 : index
    %c2 = arith.constant 2 : index
    %41 = vector.load %arg1[%c0_17, %c2] : memref<8x8xi32, #tpu.memory_space<vmem>>, vector<8x1xi32>
    %42 = vector.broadcast %41 : vector<8x1xi32> to vector<8x38xi32>
    %43 = arith.cmpi eq, %42, %0 : vector<8x38xi32>
    %44 = arith.extui %43 : vector<8x38xi1> to vector<8x38xi32>
    %45 = arith.sitofp %44 : vector<8x38xi32> to vector<8x38xf32>
    %c0_18 = arith.constant 0 : index
    %c0_19 = arith.constant 0 : index
    %46 = vector.load %arg2[%c0_18, %c0_19] : memref<38x32xf32, #tpu.memory_space<vmem>>, vector<38x32xf32>
    %cst_20 = arith.constant dense<0.000000e+00> : vector<8x32xf32>
    %47 = tpu.matmul %45, %46, %cst_20 {dimension_numbers = #tpu.dot_dimension_numbers<[1], [0], [0], [1], [0, 0, 1, 1], [], []>} : vector<8x38xf32>, vector<38x32xf32>, vector<8x32xf32> -> vector<8x32xf32>
    %c2_21 = arith.constant 2 : index
    %c0_22 = arith.constant 0 : index
    %48 = vector.load %arg3[%c2_21, %c0_22] : memref<8x32xf32, #tpu.memory_space<vmem>>, vector<1x32xf32>
    %49 = vector.broadcast %48 : vector<1x32xf32> to vector<8x32xf32>
    %50 = arith.addf %47, %49 : vector<8x32xf32>
    %51 = arith.mulf %50, %50 : vector<8x32xf32>
    %cst_23 = arith.constant dense<0.000000e+00> : vector<8xf32>
    %52 = vector.multi_reduction <add>, %51, %cst_23 [1] : vector<8x32xf32> to vector<8xf32>
    %53 = vector.shape_cast %52 : vector<8xf32> to vector<8x1xf32>
    %cst_24 = arith.constant 1.000000e-24 : f32
    %54 = vector.broadcast %cst_24 : f32 to vector<8x1xf32>
    %55 = arith.maximumf %53, %54 : vector<8x1xf32>
    %56 = math.rsqrt %55 : vector<8x1xf32>
    %cst_25 = arith.constant 5.65685415 : f32
    %57 = vector.broadcast %cst_25 : f32 to vector<8x1xf32>
    %58 = arith.mulf %56, %57 : vector<8x1xf32>
    %59 = vector.broadcast %58 : vector<8x1xf32> to vector<8x32xf32>
    %60 = arith.mulf %50, %59 : vector<8x32xf32>
    %c0_26 = arith.constant 0 : index
    %c3 = arith.constant 3 : index
    %61 = vector.load %arg1[%c0_26, %c3] : memref<8x8xi32, #tpu.memory_space<vmem>>, vector<8x1xi32>
    %62 = vector.broadcast %61 : vector<8x1xi32> to vector<8x38xi32>
    %63 = arith.cmpi eq, %62, %0 : vector<8x38xi32>
    %64 = arith.extui %63 : vector<8x38xi1> to vector<8x38xi32>
    %65 = arith.sitofp %64 : vector<8x38xi32> to vector<8x38xf32>
    %c0_27 = arith.constant 0 : index
    %c0_28 = arith.constant 0 : index
    %66 = vector.load %arg2[%c0_27, %c0_28] : memref<38x32xf32, #tpu.memory_space<vmem>>, vector<38x32xf32>
    %cst_29 = arith.constant dense<0.000000e+00> : vector<8x32xf32>
    %67 = tpu.matmul %65, %66, %cst_29 {dimension_numbers = #tpu.dot_dimension_numbers<[1], [0], [0], [1], [0, 0, 1, 1], [], []>} : vector<8x38xf32>, vector<38x32xf32>, vector<8x32xf32> -> vector<8x32xf32>
    %c3_30 = arith.constant 3 : index
    %c0_31 = arith.constant 0 : index
    %68 = vector.load %arg3[%c3_30, %c0_31] : memref<8x32xf32, #tpu.memory_space<vmem>>, vector<1x32xf32>
    %69 = vector.broadcast %68 : vector<1x32xf32> to vector<8x32xf32>
    %70 = arith.addf %67, %69 : vector<8x32xf32>
    %71 = arith.mulf %70, %70 : vector<8x32xf32>
    %cst_32 = arith.constant dense<0.000000e+00> : vector<8xf32>
    %72 = vector.multi_reduction <add>, %71, %cst_32 [1] : vector<8x32xf32> to vector<8xf32>
    %73 = vector.shape_cast %72 : vector<8xf32> to vector<8x1xf32>
    %cst_33 = arith.constant 1.000000e-24 : f32
    %74 = vector.broadcast %cst_33 : f32 to vector<8x1xf32>
    %75 = arith.maximumf %73, %74 : vector<8x1xf32>
    %76 = math.rsqrt %75 : vector<8x1xf32>
    %cst_34 = arith.constant 5.65685415 : f32
    %77 = vector.broadcast %cst_34 : f32 to vector<8x1xf32>
    %78 = arith.mulf %76, %77 : vector<8x1xf32>
    %79 = vector.broadcast %78 : vector<8x1xf32> to vector<8x32xf32>
    %80 = arith.mulf %70, %79 : vector<8x32xf32>
    %c0_35 = arith.constant 0 : index
    %c4 = arith.constant 4 : index
    %81 = vector.load %arg1[%c0_35, %c4] : memref<8x8xi32, #tpu.memory_space<vmem>>, vector<8x1xi32>
    %82 = vector.broadcast %81 : vector<8x1xi32> to vector<8x38xi32>
    %83 = arith.cmpi eq, %82, %0 : vector<8x38xi32>
    %84 = arith.extui %83 : vector<8x38xi1> to vector<8x38xi32>
    %85 = arith.sitofp %84 : vector<8x38xi32> to vector<8x38xf32>
    %c0_36 = arith.constant 0 : index
    %c0_37 = arith.constant 0 : index
    %86 = vector.load %arg2[%c0_36, %c0_37] : memref<38x32xf32, #tpu.memory_space<vmem>>, vector<38x32xf32>
    %cst_38 = arith.constant dense<0.000000e+00> : vector<8x32xf32>
    %87 = tpu.matmul %85, %86, %cst_38 {dimension_numbers = #tpu.dot_dimension_numbers<[1], [0], [0], [1], [0, 0, 1, 1], [], []>} : vector<8x38xf32>, vector<38x32xf32>, vector<8x32xf32> -> vector<8x32xf32>
    %c4_39 = arith.constant 4 : index
    %c0_40 = arith.constant 0 : index
    %88 = vector.load %arg3[%c4_39, %c0_40] : memref<8x32xf32, #tpu.memory_space<vmem>>, vector<1x32xf32>
    %89 = vector.broadcast %88 : vector<1x32xf32> to vector<8x32xf32>
    %90 = arith.addf %87, %89 : vector<8x32xf32>
    %91 = arith.mulf %90, %90 : vector<8x32xf32>
    %cst_41 = arith.constant dense<0.000000e+00> : vector<8xf32>
    %92 = vector.multi_reduction <add>, %91, %cst_41 [1] : vector<8x32xf32> to vector<8xf32>
    %93 = vector.shape_cast %92 : vector<8xf32> to vector<8x1xf32>
    %cst_42 = arith.constant 1.000000e-24 : f32
    %94 = vector.broadcast %cst_42 : f32 to vector<8x1xf32>
    %95 = arith.maximumf %93, %94 : vector<8x1xf32>
    %96 = math.rsqrt %95 : vector<8x1xf32>
    %cst_43 = arith.constant 5.65685415 : f32
    %97 = vector.broadcast %cst_43 : f32 to vector<8x1xf32>
    %98 = arith.mulf %96, %97 : vector<8x1xf32>
    %99 = vector.broadcast %98 : vector<8x1xf32> to vector<8x32xf32>
    %100 = arith.mulf %90, %99 : vector<8x32xf32>
    %c0_44 = arith.constant 0 : index
    %c5 = arith.constant 5 : index
    %101 = vector.load %arg1[%c0_44, %c5] : memref<8x8xi32, #tpu.memory_space<vmem>>, vector<8x1xi32>
    %102 = vector.broadcast %101 : vector<8x1xi32> to vector<8x38xi32>
    %103 = arith.cmpi eq, %102, %0 : vector<8x38xi32>
    %104 = arith.extui %103 : vector<8x38xi1> to vector<8x38xi32>
    %105 = arith.sitofp %104 : vector<8x38xi32> to vector<8x38xf32>
    %c0_45 = arith.constant 0 : index
    %c0_46 = arith.constant 0 : index
    %106 = vector.load %arg2[%c0_45, %c0_46] : memref<38x32xf32, #tpu.memory_space<vmem>>, vector<38x32xf32>
    %cst_47 = arith.constant dense<0.000000e+00> : vector<8x32xf32>
    %107 = tpu.matmul %105, %106, %cst_47 {dimension_numbers = #tpu.dot_dimension_numbers<[1], [0], [0], [1], [0, 0, 1, 1], [], []>} : vector<8x38xf32>, vector<38x32xf32>, vector<8x32xf32> -> vector<8x32xf32>
    %c5_48 = arith.constant 5 : index
    %c0_49 = arith.constant 0 : index
    %108 = vector.load %arg3[%c5_48, %c0_49] : memref<8x32xf32, #tpu.memory_space<vmem>>, vector<1x32xf32>
    %109 = vector.broadcast %108 : vector<1x32xf32> to vector<8x32xf32>
    %110 = arith.addf %107, %109 : vector<8x32xf32>
    %111 = arith.mulf %110, %110 : vector<8x32xf32>
    %cst_50 = arith.constant dense<0.000000e+00> : vector<8xf32>
    %112 = vector.multi_reduction <add>, %111, %cst_50 [1] : vector<8x32xf32> to vector<8xf32>
    %113 = vector.shape_cast %112 : vector<8xf32> to vector<8x1xf32>
    %cst_51 = arith.constant 1.000000e-24 : f32
    %114 = vector.broadcast %cst_51 : f32 to vector<8x1xf32>
    %115 = arith.maximumf %113, %114 : vector<8x1xf32>
    %116 = math.rsqrt %115 : vector<8x1xf32>
    %cst_52 = arith.constant 5.65685415 : f32
    %117 = vector.broadcast %cst_52 : f32 to vector<8x1xf32>
    %118 = arith.mulf %116, %117 : vector<8x1xf32>
    %119 = vector.broadcast %118 : vector<8x1xf32> to vector<8x32xf32>
    %120 = arith.mulf %110, %119 : vector<8x32xf32>
    %c0_53 = arith.constant 0 : index
    %c6 = arith.constant 6 : index
    %121 = vector.load %arg1[%c0_53, %c6] : memref<8x8xi32, #tpu.memory_space<vmem>>, vector<8x1xi32>
    %122 = vector.broadcast %121 : vector<8x1xi32> to vector<8x38xi32>
    %123 = arith.cmpi eq, %122, %0 : vector<8x38xi32>
    %124 = arith.extui %123 : vector<8x38xi1> to vector<8x38xi32>
    %125 = arith.sitofp %124 : vector<8x38xi32> to vector<8x38xf32>
    %c0_54 = arith.constant 0 : index
    %c0_55 = arith.constant 0 : index
    %126 = vector.load %arg2[%c0_54, %c0_55] : memref<38x32xf32, #tpu.memory_space<vmem>>, vector<38x32xf32>
    %cst_56 = arith.constant dense<0.000000e+00> : vector<8x32xf32>
    %127 = tpu.matmul %125, %126, %cst_56 {dimension_numbers = #tpu.dot_dimension_numbers<[1], [0], [0], [1], [0, 0, 1, 1], [], []>} : vector<8x38xf32>, vector<38x32xf32>, vector<8x32xf32> -> vector<8x32xf32>
    %c6_57 = arith.constant 6 : index
    %c0_58 = arith.constant 0 : index
    %128 = vector.load %arg3[%c6_57, %c0_58] : memref<8x32xf32, #tpu.memory_space<vmem>>, vector<1x32xf32>
    %129 = vector.broadcast %128 : vector<1x32xf32> to vector<8x32xf32>
    %130 = arith.addf %127, %129 : vector<8x32xf32>
    %131 = arith.mulf %130, %130 : vector<8x32xf32>
    %cst_59 = arith.constant dense<0.000000e+00> : vector<8xf32>
    %132 = vector.multi_reduction <add>, %131, %cst_59 [1] : vector<8x32xf32> to vector<8xf32>
    %133 = vector.shape_cast %132 : vector<8xf32> to vector<8x1xf32>
    %cst_60 = arith.constant 1.000000e-24 : f32
    %134 = vector.broadcast %cst_60 : f32 to vector<8x1xf32>
    %135 = arith.maximumf %133, %134 : vector<8x1xf32>
    %136 = math.rsqrt %135 : vector<8x1xf32>
    %cst_61 = arith.constant 5.65685415 : f32
    %137 = vector.broadcast %cst_61 : f32 to vector<8x1xf32>
    %138 = arith.mulf %136, %137 : vector<8x1xf32>
    %139 = vector.broadcast %138 : vector<8x1xf32> to vector<8x32xf32>
    %140 = arith.mulf %130, %139 : vector<8x32xf32>
    %c0_62 = arith.constant 0 : index
    %c7 = arith.constant 7 : index
    %141 = vector.load %arg1[%c0_62, %c7] : memref<8x8xi32, #tpu.memory_space<vmem>>, vector<8x1xi32>
    %142 = vector.broadcast %141 : vector<8x1xi32> to vector<8x38xi32>
    %143 = arith.cmpi eq, %142, %0 : vector<8x38xi32>
    %144 = arith.extui %143 : vector<8x38xi1> to vector<8x38xi32>
    %145 = arith.sitofp %144 : vector<8x38xi32> to vector<8x38xf32>
    %c0_63 = arith.constant 0 : index
    %c0_64 = arith.constant 0 : index
    %146 = vector.load %arg2[%c0_63, %c0_64] : memref<38x32xf32, #tpu.memory_space<vmem>>, vector<38x32xf32>
    %cst_65 = arith.constant dense<0.000000e+00> : vector<8x32xf32>
    %147 = tpu.matmul %145, %146, %cst_65 {dimension_numbers = #tpu.dot_dimension_numbers<[1], [0], [0], [1], [0, 0, 1, 1], [], []>} : vector<8x38xf32>, vector<38x32xf32>, vector<8x32xf32> -> vector<8x32xf32>
    %c7_66 = arith.constant 7 : index
    %c0_67 = arith.constant 0 : index
    %148 = vector.load %arg3[%c7_66, %c0_67] : memref<8x32xf32, #tpu.memory_space<vmem>>, vector<1x32xf32>
    %149 = vector.broadcast %148 : vector<1x32xf32> to vector<8x32xf32>
    %150 = arith.addf %147, %149 : vector<8x32xf32>
    %151 = arith.mulf %150, %150 : vector<8x32xf32>
    %cst_68 = arith.constant dense<0.000000e+00> : vector<8xf32>
    %152 = vector.multi_reduction <add>, %151, %cst_68 [1] : vector<8x32xf32> to vector<8xf32>
    %153 = vector.shape_cast %152 : vector<8xf32> to vector<8x1xf32>
    %cst_69 = arith.constant 1.000000e-24 : f32
    %154 = vector.broadcast %cst_69 : f32 to vector<8x1xf32>
    %155 = arith.maximumf %153, %154 : vector<8x1xf32>
    %156 = math.rsqrt %155 : vector<8x1xf32>
    %cst_70 = arith.constant 5.65685415 : f32
    %157 = vector.broadcast %cst_70 : f32 to vector<8x1xf32>
    %158 = arith.mulf %156, %157 : vector<8x1xf32>
    %159 = vector.broadcast %158 : vector<8x1xf32> to vector<8x32xf32>
    %160 = arith.mulf %150, %159 : vector<8x32xf32>
    %161 = tpu.concatenate %20, %40, %60, %80, %100, %120, %140, %160 in 1 : vector<8x32xf32>, vector<8x32xf32>, vector<8x32xf32>, vector<8x32xf32>, vector<8x32xf32>, vector<8x32xf32>, vector<8x32xf32>, vector<8x32xf32> -> vector<8x256xf32>
    %c0_71 = arith.constant 0 : index
    %c0_72 = arith.constant 0 : index
    %162 = vector.load %arg4[%c0_71, %c0_72] : memref<8x256xf32, #tpu.memory_space<vmem>>, vector<8x256xf32>
    tpu.vector_store %arg4[%c0_71, %c0_72], %161 {strides = array<i32>} : memref<8x256xf32, #tpu.memory_space<vmem>>, vector<8x256xf32>,
    return
  }
  func.func @transform_0(%arg0: i32) -> (i32, i32) {
    %c0_i32 = arith.constant 0 : i32
    %c0_i32_0 = arith.constant 0 : i32
    return %arg0, %c0_i32 : i32, i32
  }
  func.func @transform_1(%arg0: i32) -> (i32, i32) {
    %c0_i32 = arith.constant 0 : i32
    %c0_i32_0 = arith.constant 0 : i32
    %c0_i32_1 = arith.constant 0 : i32
    return %c0_i32, %c0_i32_0 : i32, i32
  }
  func.func @transform_2(%arg0: i32) -> (i32, i32) {
    %c0_i32 = arith.constant 0 : i32
    %c0_i32_0 = arith.constant 0 : i32
    %c0_i32_1 = arith.constant 0 : i32
    return %c0_i32, %c0_i32_0 : i32, i32
  }
  func.func @transform_3(%arg0: i32) -> (i32, i32) {
    %c0_i32 = arith.constant 0 : i32
    %c0_i32_0 = arith.constant 0 : i32
    return %arg0, %c0_i32 : i32, i32
  }
}

</mosaic_0001>

<llo_original>
// kernel: tpu_custom_call.1
$region0: #{tpu_custom_call.1}
  #allocation0 [shape = 'u32[]', space=smem, size = 0x4, offset = 0x4, fixed_abs, tag = 'smem constant byte address 0x4 - core index']
  #allocation1 [shape = 'u32[72,128]{1,0:T(1,128)}', space=vmem, size = 0x9000, scoped, tag = 'internal scratch']
  %s0 = inlined_call_operand.vmem [shape: s32[8,8], index: 0, kind: input, shape index: {}]
  %s1 = inlined_call_operand.vmem [shape: f32[38,32], index: 1, kind: input, shape index: {}]
  %s2 = inlined_call_operand.vmem [shape: f32[8,32], index: 2, kind: input, shape index: {}]
  %s3 = inlined_call_operand.hbm [shape: f32[8,256], index: 3, kind: output, shape index: {}]
  %s4 = sld [smem:[#allocation0]]
  $region22: #{tpu_custom_call.1} parent=0
    _
  %s6 = ssub.s32 1, %s4
  %s7 = scalar_select 0, %s6, %s4
  $region1: #{tpu_custom_call.1} parent=0
    #allocation2 [shape = 'u8[8192]{0}', space=vmem, size = 0x2000, scoped, tag = 'output window, operand 0, single buffered']
    #allocation3 [shape = 's32[1]{0}', space=sflag, size = 0x4, scoped, tag = 'scoped memory for tpu_custom_call.1']
    %8 = vsyncpa [#allocation3], 0
    // Predicated region
    $region2: #{tpu_custom_call.1} parent=1 // pred_check
      _
    $region3: #{tpu_custom_call.1} parent=1 // pred_check_branch
      %10 = sbr.rel (0) target = $region5
    $region4: #{tpu_custom_call.1} parent=1 // pred_region
      _
    $region5: #{tpu_custom_call.1} parent=1 // pred_fallthru
      _
    // Predicated region
    $region6: #{tpu_custom_call.1} parent=1 // pred_check
      _
    $region7: #{tpu_custom_call.1} parent=1 // pred_check_branch
      %12 = sbr.rel (0) target = $region9
    $region8: #{tpu_custom_call.1} parent=1 // pred_region
      _
    $region9: #{tpu_custom_call.1} parent=1 // pred_fallthru
      _
    // Predicated region
    $region10: #{tpu_custom_call.1} parent=1 // pred_check
      _
    $region11: #{tpu_custom_call.1} parent=1 // pred_check_branch
      %14 = sbr.rel (0) target = $region13
    $region12: #{tpu_custom_call.1} parent=1 // pred_region
      _
    $region13: #{tpu_custom_call.1} parent=1 // pred_fallthru
      _
    %v15 = vlaneseq
    %v16 = vand.u32 %v15, 127
    %v17 = vld [vmem:[%s0] sm:$0xff]
    %18 = vset.pattern.permute.xlu0 0
    %19 = vperm.xlu0 %18, %v17
    %v20 = vpop.permute.xlu0 %19
    %vm21 = vcmp.eq.s32.totalorder %v20, %v16
    %v22 = vsel %vm21, 1, 0
    %v23 = vcvt.s32.f32 %v22
    %v24 = vld [vmem:[%s1] sm:$0xff]
    %v25 = vld [vmem:[%s1 + $0x8] sm:$0xff]
    %v26 = vld [vmem:[%s1 + $0x10] sm:$0xff]
    %v27 = vld [vmem:[%s1 + $0x18] sm:$0xff]
    %v28 = vld [vmem:[%s1 + $0x20] sm:$0x3f]
    %v29 = vld [vmem:[%s2] sm:$0x1]
    %v30 = vperm.slane %v29, 0
    %vm31 = vcmask 310272
    %v33 = vsel %vm31, %v23, 0
    %vm35 = vcmask 1045504
    %v37 = vsel %vm35, %v28, 0
    %39 = vmatpush.msra.mxu0 0.0
    %40 = vmatpush.msra.mxu0 0.0
    %41 = vmatpush.msra.mxu0 0.0
    %42 = vmatpush.msra.mxu0 0.0
    %43 = vmatpush.msra.mxu0 0.0
    %44 = vmatpush.msra.mxu0 0.0
    %45 = vmatpush.msra.mxu0 0.0
    %46 = vmatpush.msra.mxu0 0.0
    %47 = vmatpush.msra.mxu0 0.0
    %48 = vmatpush.msra.mxu0 0.0
    %49 = vmatpush.msra.mxu0 0.0
    %50 = vmatpush.msra.mxu0 %v37
    %51 = vmatpush.msra.mxu0 %v27
    %52 = vmatpush.msra.mxu0 %v26
    %53 = vmatpush.msra.mxu0 %v25
    %54 = vmatpush.msra.mxu0 %v24
    %55 = vmatmul.f32.gmra.mxu0 %v33
    %v56 = vpop.f32.mrf.mxu0
    %v57 = vadd.f32 %v30, %v56
    %58 = vdwg.mxu0
    %v59 = vmul.f32 %v57, %v57
    %vm60 = vcmask 261120
    %v61 = vsel %vm60, %v59, 0.0
    %62 = vadd.xlane.f32.xlu0 %v61
    %v63 = vpop.xlane.xlu0 %62
    %v64 = vmax.f32 %v63, 1e-24
    %v65 = vrsqrt.pop %v64
    %v66 = vmul.f32 %v65, %v64
    %v67 = vmul.f32 %v66, %v65
    %v68 = vmul.f32 0.5, %v67
    %v69 = vsub.f32 1.5, %v68
    %v70 = vmul.f32 %v65, %v69
    %vm71 = vweird.f32 %v64
    %vm72 = vweird.f32 %v65
    %vm73 = vmor %vm71, %vm72
    %v74 = vsel %vm73, %v65, %v70
    %v75 = vmul.f32 %v74, 5.656854
    %v76 = vmul.f32 %v57, %v75
    %77 = vset.pattern.permute.xlu0 1
    %78 = vperm.xlu0 %77, %v17
    %v79 = vpop.permute.xlu0 %78
    %vm80 = vcmp.eq.s32.totalorder %v79, %v16
    %v81 = vsel %vm80, 1, 0
    %v82 = vcvt.s32.f32 %v81
    %v83 = vld [vmem:[%s2 + $0x1] sm:$0x1]
    %v84 = vperm.slane %v83, 0
    %v86 = vsel %vm31, %v82, 0
    %88 = vmatpush.msra.mxu0 0.0
    %89 = vmatpush.msra.mxu0 0.0
    %90 = vmatpush.msra.mxu0 0.0
    %91 = vmatpush.msra.mxu0 0.0
    %92 = vmatpush.msra.mxu0 0.0
    %93 = vmatpush.msra.mxu0 0.0
    %94 = vmatpush.msra.mxu0 0.0
    %95 = vmatpush.msra.mxu0 0.0
    %96 = vmatpush.msra.mxu0 0.0
    %97 = vmatpush.msra.mxu0 0.0
    %98 = vmatpush.msra.mxu0 0.0
    %99 = vmatpush.msra.mxu0 %v37
    %100 = vmatpush.msra.mxu0 %v27
    %101 = vmatpush.msra.mxu0 %v26
    %102 = vmatpush.msra.mxu0 %v25
    %103 = vmatpush.msra.mxu0 %v24
    %104 = vmatmul.f32.gmra.mxu0 %v86
    %v105 = vpop.f32.mrf.mxu0
    %v106 = vadd.f32 %v84, %v105
    %107 = vdwg.mxu0
    %v108 = vmul.f32 %v106, %v106
    %v109 = vsel %vm60, %v108, 0.0
    %110 = vadd.xlane.f32.xlu0 %v109
    %v111 = vpop.xlane.xlu0 %110
    %v112 = vmax.f32 %v111, 1e-24
    %v113 = vrsqrt.pop %v112
    %v114 = vmul.f32 %v113, %v112
    %v115 = vmul.f32 %v114, %v113
    %v116 = vmul.f32 0.5, %v115
    %v117 = vsub.f32 1.5, %v116
    %v118 = vmul.f32 %v113, %v117
    %vm119 = vweird.f32 %v112
    %vm120 = vweird.f32 %v113
    %vm121 = vmor %vm119, %vm120
    %v122 = vsel %vm121, %v113, %v118
    %v123 = vmul.f32 %v122, 5.656854
    %v124 = vmul.f32 %v106, %v123
    %125 = vset.pattern.permute.xlu0 2
    %126 = vperm.xlu0 %125, %v17
    %v127 = vpop.permute.xlu0 %126
    %vm128 = vcmp.eq.s32.totalorder %v127, %v16
    %v129 = vsel %vm128, 1, 0
    %v130 = vcvt.s32.f32 %v129
    %v131 = vld [vmem:[%s2 + $0x2] sm:$0x1]
    %v132 = vperm.slane %v131, 0
    %v134 = vsel %vm31, %v130, 0
    %136 = vmatpush.msra.mxu0 0.0
    %137 = vmatpush.msra.mxu0 0.0
    %138 = vmatpush.msra.mxu0 0.0
    %139 = vmatpush.msra.mxu0 0.0
    %140 = vmatpush.msra.mxu0 0.0
    %141 = vmatpush.msra.mxu0 0.0
    %142 = vmatpush.msra.mxu0 0.0
    %143 = vmatpush.msra.mxu0 0.0
    %144 = vmatpush.msra.mxu0 0.0
    %145 = vmatpush.msra.mxu0 0.0
    %146 = vmatpush.msra.mxu0 0.0
    %147 = vmatpush.msra.mxu0 %v37
    %148 = vmatpush.msra.mxu0 %v27
    %149 = vmatpush.msra.mxu0 %v26
    %150 = vmatpush.msra.mxu0 %v25
    %151 = vmatpush.msra.mxu0 %v24
    %152 = vmatmul.f32.gmra.mxu0 %v134
    %v153 = vpop.f32.mrf.mxu0
    %v154 = vadd.f32 %v132, %v153
    %155 = vdwg.mxu0
    %v156 = vmul.f32 %v154, %v154
    %v157 = vsel %vm60, %v156, 0.0
    %158 = vadd.xlane.f32.xlu0 %v157
    %v159 = vpop.xlane.xlu0 %158
    %v160 = vmax.f32 %v159, 1e-24
    %v161 = vrsqrt.pop %v160
    %v162 = vmul.f32 %v161, %v160
    %v163 = vmul.f32 %v162, %v161
    %v164 = vmul.f32 0.5, %v163
    %v165 = vsub.f32 1.5, %v164
    %v166 = vmul.f32 %v161, %v165
    %vm167 = vweird.f32 %v160
    %vm168 = vweird.f32 %v161
    %vm169 = vmor %vm167, %vm168
    %v170 = vsel %vm169, %v161, %v166
    %v171 = vmul.f32 %v170, 5.656854
    %v172 = vmul.f32 %v154, %v171
    %173 = vset.pattern.permute.xlu0 3
    %174 = vperm.xlu0 %173, %v17
    %v175 = vpop.permute.xlu0 %174
    %vm176 = vcmp.eq.s32.totalorder %v175, %v16
    %v177 = vsel %vm176, 1, 0
    %v178 = vcvt.s32.f32 %v177
    %v179 = vld [vmem:[%s2 + $0x3] sm:$0x1]
    %v180 = vperm.slane %v179, 0
    %v182 = vsel %vm31, %v178, 0
    %184 = vmatpush.msra.mxu0 0.0
    %185 = vmatpush.msra.mxu0 0.0
    %186 = vmatpush.msra.mxu0 0.0
    %187 = vmatpush.msra.mxu0 0.0
    %188 = vmatpush.msra.mxu0 0.0
    %189 = vmatpush.msra.mxu0 0.0
    %190 = vmatpush.msra.mxu0 0.0
    %191 = vmatpush.msra.mxu0 0.0
    %192 = vmatpush.msra.mxu0 0.0
    %193 = vmatpush.msra.mxu0 0.0
    %194 = vmatpush.msra.mxu0 0.0
    %195 = vmatpush.msra.mxu0 %v37
    %196 = vmatpush.msra.mxu0 %v27
    %197 = vmatpush.msra.mxu0 %v26
    %198 = vmatpush.msra.mxu0 %v25
    %199 = vmatpush.msra.mxu0 %v24
    %200 = vmatmul.f32.gmra.mxu0 %v182
    %v201 = vpop.f32.mrf.mxu0
    %v202 = vadd.f32 %v180, %v201
    %203 = vdwg.mxu0
    %v204 = vmul.f32 %v202, %v202
    %v205 = vsel %vm60, %v204, 0.0
    %206 = vadd.xlane.f32.xlu0 %v205
    %v207 = vpop.xlane.xlu0 %206
    %v208 = vmax.f32 %v207, 1e-24
    %v209 = vrsqrt.pop %v208
    %v210 = vmul.f32 %v209, %v208
    %v211 = vmul.f32 %v210, %v209
    %v212 = vmul.f32 0.5, %v211
    %v213 = vsub.f32 1.5, %v212
    %v214 = vmul.f32 %v209, %v213
    %vm215 = vweird.f32 %v208
    %vm216 = vweird.f32 %v209
    %vm217 = vmor %vm215, %vm216
    %v218 = vsel %vm217, %v209, %v214
    %v219 = vmul.f32 %v218, 5.656854
    %v220 = vmul.f32 %v202, %v219
    %221 = vset.pattern.permute.xlu0 4
    %222 = vperm.xlu0 %221, %v17
    %v223 = vpop.permute.xlu0 %222
    %vm224 = vcmp.eq.s32.totalorder %v223, %v16
    %v225 = vsel %vm224, 1, 0
    %v226 = vcvt.s32.f32 %v225
    %v227 = vld [vmem:[%s2 + $0x4] sm:$0x1]
    %v228 = vperm.slane %v227, 0
    %v230 = vsel %vm31, %v226, 0
    %232 = vmatpush.msra.mxu0 0.0
    %233 = vmatpush.msra.mxu0 0.0
    %234 = vmatpush.msra.mxu0 0.0
    %235 = vmatpush.msra.mxu0 0.0
    %236 = vmatpush.msra.mxu0 0.0
    %237 = vmatpush.msra.mxu0 0.0
    %238 = vmatpush.msra.mxu0 0.0
    %239 = vmatpush.msra.mxu0 0.0
    %240 = vmatpush.msra.mxu0 0.0
    %241 = vmatpush.msra.mxu0 0.0
    %242 = vmatpush.msra.mxu0 0.0
    %243 = vmatpush.msra.mxu0 %v37
    %244 = vmatpush.msra.mxu0 %v27
    %245 = vmatpush.msra.mxu0 %v26
    %246 = vmatpush.msra.mxu0 %v25
    %247 = vmatpush.msra.mxu0 %v24
    %248 = vmatmul.f32.gmra.mxu0 %v230
    %v249 = vpop.f32.mrf.mxu0
    %v250 = vadd.f32 %v228, %v249
    %251 = vdwg.mxu0
    %v252 = vmul.f32 %v250, %v250
    %v253 = vsel %vm60, %v252, 0.0
    %254 = vadd.xlane.f32.xlu0 %v253
    %v255 = vpop.xlane.xlu0 %254
    %v256 = vmax.f32 %v255, 1e-24
    %v257 = vrsqrt.pop %v256
    %v258 = vmul.f32 %v257, %v256
    %v259 = vmul.f32 %v258, %v257
    %v260 = vmul.f32 0.5, %v259
    %v261 = vsub.f32 1.5, %v260
    %v262 = vmul.f32 %v257, %v261
    %vm263 = vweird.f32 %v256
    %vm264 = vweird.f32 %v257
    %vm265 = vmor %vm263, %vm264
    %v266 = vsel %vm265, %v257, %v262
    %v267 = vmul.f32 %v266, 5.656854
    %v268 = vmul.f32 %v250, %v267
    %269 = vset.pattern.permute.xlu0 5
    %270 = vperm.xlu0 %269, %v17
    %v271 = vpop.permute.xlu0 %270
    %vm272 = vcmp.eq.s32.totalorder %v271, %v16
    %v273 = vsel %vm272, 1, 0
    %v274 = vcvt.s32.f32 %v273
    %v275 = vld [vmem:[%s2 + $0x5] sm:$0x1]
    %v276 = vperm.slane %v275, 0
    %v278 = vsel %vm31, %v274, 0
    %280 = vmatpush.msra.mxu0 0.0
    %281 = vmatpush.msra.mxu0 0.0
    %282 = vmatpush.msra.mxu0 0.0
    %283 = vmatpush.msra.mxu0 0.0
    %284 = vmatpush.msra.mxu0 0.0
    %285 = vmatpush.msra.mxu0 0.0
    %286 = vmatpush.msra.mxu0 0.0
    %287 = vmatpush.msra.mxu0 0.0
    %288 = vmatpush.msra.mxu0 0.0
    %289 = vmatpush.msra.mxu0 0.0
    %290 = vmatpush.msra.mxu0 0.0
    %291 = vmatpush.msra.mxu0 %v37
    %292 = vmatpush.msra.mxu0 %v27
    %293 = vmatpush.msra.mxu0 %v26
    %294 = vmatpush.msra.mxu0 %v25
    %295 = vmatpush.msra.mxu0 %v24
    %296 = vmatmul.f32.gmra.mxu0 %v278
    %v297 = vpop.f32.mrf.mxu0
    %v298 = vadd.f32 %v276, %v297
    %299 = vdwg.mxu0
    %v300 = vmul.f32 %v298, %v298
    %v301 = vsel %vm60, %v300, 0.0
    %302 = vadd.xlane.f32.xlu0 %v301
    %v303 = vpop.xlane.xlu0 %302
    %v304 = vmax.f32 %v303, 1e-24
    %v305 = vrsqrt.pop %v304
    %v306 = vmul.f32 %v305, %v304
    %v307 = vmul.f32 %v306, %v305
    %v308 = vmul.f32 0.5, %v307
    %v309 = vsub.f32 1.5, %v308
    %v310 = vmul.f32 %v305, %v309
    %vm311 = vweird.f32 %v304
    %vm312 = vweird.f32 %v305
    %vm313 = vmor %vm311, %vm312
    %v314 = vsel %vm313, %v305, %v310
    %v315 = vmul.f32 %v314, 5.656854
    %v316 = vmul.f32 %v298, %v315
    %317 = vset.pattern.permute.xlu0 6
    %318 = vperm.xlu0 %317, %v17
    %v319 = vpop.permute.xlu0 %318
    %vm320 = vcmp.eq.s32.totalorder %v319, %v16
    %v321 = vsel %vm320, 1, 0
    %v322 = vcvt.s32.f32 %v321
    %v323 = vld [vmem:[%s2 + $0x6] sm:$0x1]
    %v324 = vperm.slane %v323, 0
    %v326 = vsel %vm31, %v322, 0
    %328 = vmatpush.msra.mxu0 0.0
    %329 = vmatpush.msra.mxu0 0.0
    %330 = vmatpush.msra.mxu0 0.0
    %331 = vmatpush.msra.mxu0 0.0
    %332 = vmatpush.msra.mxu0 0.0
    %333 = vmatpush.msra.mxu0 0.0
    %334 = vmatpush.msra.mxu0 0.0
    %335 = vmatpush.msra.mxu0 0.0
    %336 = vmatpush.msra.mxu0 0.0
    %337 = vmatpush.msra.mxu0 0.0
    %338 = vmatpush.msra.mxu0 0.0
    %339 = vmatpush.msra.mxu0 %v37
    %340 = vmatpush.msra.mxu0 %v27
    %341 = vmatpush.msra.mxu0 %v26
    %342 = vmatpush.msra.mxu0 %v25
    %343 = vmatpush.msra.mxu0 %v24
    %344 = vmatmul.f32.gmra.mxu0 %v326
    %v345 = vpop.f32.mrf.mxu0
    %v346 = vadd.f32 %v324, %v345
    %347 = vdwg.mxu0
    %v348 = vmul.f32 %v346, %v346
    %v349 = vsel %vm60, %v348, 0.0
    %350 = vadd.xlane.f32.xlu0 %v349
    %v351 = vpop.xlane.xlu0 %350
    %v352 = vmax.f32 %v351, 1e-24
    %v353 = vrsqrt.pop %v352
    %v354 = vmul.f32 %v353, %v352
    %v355 = vmul.f32 %v354, %v353
    %v356 = vmul.f32 0.5, %v355
    %v357 = vsub.f32 1.5, %v356
    %v358 = vmul.f32 %v353, %v357
    %vm359 = vweird.f32 %v352
    %vm360 = vweird.f32 %v353
    %vm361 = vmor %vm359, %vm360
    %v362 = vsel %vm361, %v353, %v358
    %v363 = vmul.f32 %v362, 5.656854
    %v364 = vmul.f32 %v346, %v363
    %365 = vset.pattern.permute.xlu0 7
    %366 = vperm.xlu0 %365, %v17
    %v367 = vpop.permute.xlu0 %366
    %vm368 = vcmp.eq.s32.totalorder %v367, %v16
    %v369 = vsel %vm368, 1, 0
    %v370 = vcvt.s32.f32 %v369
    %v371 = vld [vmem:[%s2 + $0x7] sm:$0x1]
    %v372 = vperm.slane %v371, 0
    %v374 = vsel %vm31, %v370, 0
    %376 = vmatpush.msra.mxu0 0.0
    %377 = vmatpush.msra.mxu0 0.0
    %378 = vmatpush.msra.mxu0 0.0
    %379 = vmatpush.msra.mxu0 0.0
    %380 = vmatpush.msra.mxu0 0.0
    %381 = vmatpush.msra.mxu0 0.0
    %382 = vmatpush.msra.mxu0 0.0
    %383 = vmatpush.msra.mxu0 0.0
    %384 = vmatpush.msra.mxu0 0.0
    %385 = vmatpush.msra.mxu0 0.0
    %386 = vmatpush.msra.mxu0 0.0
    %387 = vmatpush.msra.mxu0 %v37
    %388 = vmatpush.msra.mxu0 %v27
    %389 = vmatpush.msra.mxu0 %v26
    %390 = vmatpush.msra.mxu0 %v25
    %391 = vmatpush.msra.mxu0 %v24
    %392 = vmatmul.f32.gmra.mxu0 %v374
    %v393 = vpop.f32.mrf.mxu0
    %v394 = vadd.f32 %v372, %v393
    %395 = vdwg.mxu0
    %v396 = vmul.f32 %v394, %v394
    %v397 = vsel %vm60, %v396, 0.0
    %398 = vadd.xlane.f32.xlu0 %v397
    %v399 = vpop.xlane.xlu0 %398
    %v400 = vmax.f32 %v399, 1e-24
    %v401 = vrsqrt.pop %v400
    %v402 = vmul.f32 %v401, %v400
    %v403 = vmul.f32 %v402, %v401
    %v404 = vmul.f32 0.5, %v403
    %v405 = vsub.f32 1.5, %v404
    %v406 = vmul.f32 %v401, %v405
    %vm407 = vweird.f32 %v400
    %vm408 = vweird.f32 %v401
    %vm409 = vmor %vm407, %vm408
    %v410 = vsel %vm409, %v401, %v406
    %v411 = vmul.f32 %v410, 5.656854
    %v412 = vmul.f32 %v394, %v411
    %414 = vrot.lane.b32.xlu0 %v124, 32
    %v415 = vpop.permute.xlu0 %414
    %418 = vrot.lane.b32.xlu0 %v172, 64
    %v419 = vpop.permute.xlu0 %418
    %422 = vrot.lane.b32.xlu0 %v220, 96
    %v423 = vpop.permute.xlu0 %422
    %426 = vrot.lane.b32.xlu0 %v316, 32
    %v427 = vpop.permute.xlu0 %426
    %430 = vrot.lane.b32.xlu0 %v364, 64
    %v431 = vpop.permute.xlu0 %430
    %434 = vrot.lane.b32.xlu0 %v412, 96
    %v435 = vpop.permute.xlu0 %434
    %v437 = vsel %vm60, %v76, %v415
    %vm438 = vcmask 523264
    %v439 = vsel %vm438, %v437, %v419
    %vm440 = vcmask 785408
    %v441 = vsel %vm440, %v439, %v423
    %v442 = vsel %vm60, %v268, %v427
    %v443 = vsel %vm438, %v442, %v431
    %v444 = vsel %vm440, %v443, %v435
    %445 = vst [vmem:[#allocation2] sm:$0xff] %v441
    %446 = vst [vmem:[#allocation2 + $0x8] sm:$0xff] %v444
    // Predicated region
    $region14: #{tpu_custom_call.1} parent=1 // pred_check
      _
    $region15: #{tpu_custom_call.1} parent=1 // pred_check_branch
      %448 = sbr.rel (0) target = $region17
    $region16: #{tpu_custom_call.1} parent=1 // pred_region
      %450 = vsyncadd [#allocation3], 0
      %s452 = sshll.u32 [#allocation2], 4
      %s453 = int_to_ptr.vmem [resolvable:$true] %s452
      %s454 = sshll.u32 %s3, 4
      %s455 = int_to_ptr.hbm [resolvable:$true] %s454
      %457 = dma.vmem_to_hbm [thread:$0]  %s453, 256, %s455, [#allocation3]
    $region17: #{tpu_custom_call.1} parent=1 // pred_fallthru
      _
    // Predicated region
    $region18: #{tpu_custom_call.1} parent=1 // pred_check
      _
    $region19: #{tpu_custom_call.1} parent=1 // pred_check_branch
      %459 = sbr.rel (0) target = $region21
    $region20: #{tpu_custom_call.1} parent=1 // pred_region
      %461 = dma.done [#allocation3], 256
    $region21: #{tpu_custom_call.1} parent=1 // pred_fallthru
      _
    %462 = vsyncpa [#allocation3], 1

</llo_original>
